<compile_context>
chip_gen: v7x
topology: tpu7x:2x2x1
jax: 0.10.0
libtpu: 0.0.40
codegen_flags: <defaults>
</compile_context>

<pallas_src>
import math

import numpy as np
import jax
import jax.numpy as jnp
from jax import lax
from jax.experimental import pallas as pl
from jax.experimental.pallas import tpu as pltpu

_BIG = 9.0e15          # matches 9000000000000000.0 in min_max_norm
_OFF_BLOCK = -3.0e38   # off-diagonal head-block fill: exp() underflows to exactly 0


def _swap_minor(x):
    """Per-batch transpose of the two minor dims of a rank-3 array."""
    if hasattr(pltpu, "einshape"):
        return pltpu.einshape("abc->acb", x)   # lane-layout-aware minor swap
    return jnp.swapaxes(x, 1, 2)


def _dis_attention_kernel(x_ref, wq_ref, wk_ref, wvt_ref, wout_ref,
                          linked_ref, fill_ref, bias_ref, out_ref):
    # x_ref    : (Bt, low, N)     lane-dense batch block (att^T per element)
    # wq_ref   : (low, H*low)     wq_cat[l, h*low+m]  = wq[h, l, m]
    # wk_ref   : (low, H*high)    wk_cat[l, h*high+d] = wk[h, l, d]
    # wvt_ref  : (H*low, low)     wv_catT[h*low+m, l] = wv[h, l, m]
    # wout_ref : (H*high, high)   out_layer.weight.T
    # linked_ref, fill_ref : (H*low, H*high) folded linkage mask / softmax fill
    # bias_ref : (high, 1)
    # out_ref  : (Bt, high, N)    lane-dense output block (out^T per element)
    bt, low, _ = x_ref.shape
    hl, hh = linked_ref.shape
    high = wout_ref.shape[1]
    inv_sqrt_dk = 1.0 / math.sqrt(high)      # np.sqrt(self.dk) in the reference

    # ---- hoisted grid-step invariants -------------------------------------
    linked = linked_ref[...] > 0.0                       # (H*low, H*high) bool
    fill = fill_ref[...]                                 # (H*low, H*high) f32
    wq_bf = wq_ref[...].astype(jnp.bfloat16)
    wk_bf = wk_ref[...].astype(jnp.bfloat16)
    wvt_bf = wvt_ref[...].astype(jnp.bfloat16)
    wout_bf = wout_ref[...].astype(jnp.bfloat16)

    x_bf = x_ref[...].astype(jnp.bfloat16)               # (Bt, low, N)

    # ---- N-scale matmul #1: gram = att^T att for every batch element ------
    gram = lax.dot_general(x_bf, x_bf, (((2,), (2,)), ((0,), (0,))),
                           preferred_element_type=jnp.float32)   # (Bt, low, low)

    # ---- folded per-head chain (N-free; all heads & batch in one matmul) --
    gram2 = gram.reshape(bt * low, low).astype(jnp.bfloat16)
    qg = jnp.dot(gram2, wq_bf,
                 preferred_element_type=jnp.float32)             # (Bt*low, H*low)
    qgt = _swap_minor(qg.reshape(bt, low, hl))                   # (Bt, H*low, low)
    qgt2 = qgt.reshape(bt * hl, low).astype(jnp.bfloat16)
    e = jnp.dot(qgt2, wk_bf,
                preferred_element_type=jnp.float32)              # (Bt*H*low, H*high)
    e = e.reshape(bt, hl, hh) * inv_sqrt_dk

    # ---- min_max_norm + softmax (f32, one slab for all bt & heads) --------
    pos_e = jnp.where(linked, e, _BIG)
    neg_e = jnp.where(linked, e, -_BIG)
    min_v = jnp.min(pos_e, axis=-1, keepdims=True)
    max_v = jnp.max(neg_e, axis=-1, keepdims=True)
    den = max_v - min_v
    den = jnp.where(den == 0.0, 1e-6, den)
    en = (e - min_v) * pl.reciprocal(den, approx=True)           # EUP divide
    en = jnp.where(linked, en, fill)
    row_max = jnp.max(en, axis=-1, keepdims=True)
    probs = jnp.exp(en - row_max)
    attn = probs * pl.reciprocal(jnp.sum(probs, axis=-1, keepdims=True),
                                 approx=True)                    # (Bt, H*low, H*high)

    # ---- fold V / concat / out_layer: combined^T = sum_h Wout_h^T attn_h^T wv_h^T
    attn2 = attn.reshape(bt * hl, hh).astype(jnp.bfloat16)
    aw = jnp.dot(attn2, wout_bf,
                 preferred_element_type=jnp.float32)             # (Bt*H*low, high)
    awt = _swap_minor(aw.reshape(bt, hl, high))                  # (Bt, high, H*low)
    awt2 = awt.reshape(bt * high, hl).astype(jnp.bfloat16)
    combt = jnp.dot(awt2, wvt_bf,
                    preferred_element_type=jnp.float32)          # (Bt*high, low)
    combt = combt.reshape(bt, high, low).astype(jnp.bfloat16)

    # ---- N-scale matmul #2: out^T = combined^T att^T, lane-dense store ----
    out = lax.dot_general(combt, x_bf, (((2,), (1,)), ((0,), (0,))),
                          preferred_element_type=jnp.float32)    # (Bt, high, N)
    out_ref[...] = out + bias_ref[...]


def _pick_tiling(batch, n, low, high):
    """Pick (batch block, vmem_limit_bytes) from per-core VMEM and TC count."""
    try:
        vmem_bytes = int(pltpu.get_tpu_info().vmem_capacity_bytes)
    except Exception:
        vmem_bytes = 64 << 20                       # conservative (v7x per-core)
    # 64 MiB per core => v7x-class chip with 2 TensorCores to feed.
    num_cores = 2 if vmem_bytes <= (64 << 20) else 1

    lanes = -(-n // 128) * 128                      # lane padding of the N axis
    rows = -(-low // 8) * 8 + -(-high // 8) * 8     # sublane-padded rows / element
    per_elem = 2 * rows * lanes * 4                 # double-buffered in+out blocks
    budget = vmem_bytes // 3
    max_bt = max(1, min(batch, budget // max(per_elem, 1)))

    divisors = [d for d in range(1, batch + 1) if batch % d == 0 and d <= max_bt]
    if num_cores == 1:
        bt = max(divisors)                          # single TC: fewest grid steps
    else:
        even = [d for d in divisors if (batch // d) % num_cores == 0]
        bt = max(even) if even else max(divisors)   # even step count for 2 TCs
    vmem_limit = int(min(vmem_bytes * 3 // 4, 96 << 20))
    return bt, vmem_limit


@jax.jit
def dis_attention(x, wq, wk, wv, linkage, out_w, out_b):
    """x: (B, N, low) -> (B, N, high).  Mirrors DisAttention.forward."""
    B, N, low = x.shape
    H, _, high = wk.shape
    bt, vmem_limit = _pick_tiling(B, N, low, high)

    # Lane-dense activations: graph-node axis N last.
    xt = jnp.swapaxes(x, 1, 2)                                   # (B, low, N)

    # Folded weights (tiny; built once per call in XLA).
    wq_cat = jnp.transpose(wq, (1, 0, 2)).reshape(low, H * low)
    wk_cat = jnp.transpose(wk, (1, 0, 2)).reshape(low, H * high)
    wv_catt = jnp.transpose(wv, (0, 2, 1)).reshape(H * low, low)
    wout = jnp.transpose(out_w)                                  # (H*high, high)
    bias = out_b.reshape(high, 1)

    # Folded (block-diagonal) linkage mask and softmax fill.
    blk = jnp.kron(jnp.eye(H, dtype=jnp.float32),
                   jnp.ones((low, high), jnp.float32))           # (H*low, H*high)
    linked = blk * jnp.tile((linkage > 0.0).astype(jnp.float32), (H, H))
    fill = jnp.where(blk > 0.0, jnp.float32(-_BIG), jnp.float32(_OFF_BLOCK))

    flops = (2 * B * N * low * (low + high)
             + 2 * B * (low * low * H * low
                        + H * low * low * H * high
                        + H * low * H * high * high
                        + high * H * low * low))
    cost = pl.CostEstimate(
        flops=flops,
        transcendentals=B * H * low * H * high,
        bytes_accessed=4 * B * N * (low + high)
        + 4 * (low * H * (low + high) + H * low * low + H * high * high
               + 2 * H * low * H * high + high))

    out_t = pl.pallas_call(
        _dis_attention_kernel,
        out_shape=jax.ShapeDtypeStruct((B, high, N), jnp.float32),
        grid=(B // bt,),
        in_specs=[
            pl.BlockSpec((bt, low, N), lambda b: (b, 0, 0)),          # x^T block
            pl.BlockSpec((low, H * low), lambda b: (0, 0)),           # wq_cat
            pl.BlockSpec((low, H * high), lambda b: (0, 0)),          # wk_cat
            pl.BlockSpec((H * low, low), lambda b: (0, 0)),           # wv_cat^T
            pl.BlockSpec((H * high, high), lambda b: (0, 0)),         # out_w.T
            pl.BlockSpec((H * low, H * high), lambda b: (0, 0)),      # folded mask
            pl.BlockSpec((H * low, H * high), lambda b: (0, 0)),      # softmax fill
            pl.BlockSpec((high, 1), lambda b: (0, 0)),                # bias
        ],
        out_specs=pl.BlockSpec((bt, high, N), lambda b: (b, 0, 0)),
        compiler_params=pltpu.CompilerParams(
            dimension_semantics=("parallel",),
            vmem_limit_bytes=vmem_limit),
        cost_estimate=cost,
    )(xt, wq_cat, wk_cat, wv_catt, wout, linked, fill, bias)

    return jnp.swapaxes(out_t, 1, 2)                              # (B, N, high)


def _reference(x, wq, wk, wv, linkage, out_w, out_b):
    """Pure-JAX mirror of the PyTorch forward (sanity check)."""
    H, low, high = wk.shape
    mask = (linkage > 0.0)[None]
    heads = []
    for h in range(H):
        Q = x @ wq[h]
        K = x @ wk[h]
        V = x @ wv[h]
        e = jnp.einsum('bnl,bnh->blh', Q, K) / np.sqrt(high)
        pos_e = jnp.where(mask, e, _BIG)
        neg_e = jnp.where(mask, e, -_BIG)
        mn = jnp.min(pos_e, axis=-1, keepdims=True)
        mx = jnp.max(neg_e, axis=-1, keepdims=True)
        den = jnp.where(mx - mn == 0.0, 1e-6, mx - mn)
        en = jnp.where(mask, (e - mn) / den, -_BIG)
        attn = jax.nn.softmax(en, axis=-1)
        heads.append(jnp.einsum('bnl,blh->bnh', V, attn))
    cat = jnp.concatenate(heads, axis=-1)
    return cat @ out_w.T + out_b


if __name__ == "__main__":
    B, N, low, high, H = 2, 8, 8, 16, 2

    key = jax.random.PRNGKey(0)
    kx, kq, kk, kv, kw, kb = jax.random.split(key, 6)

    # attention_layer.reset_parameters(): uniform(-1/sqrt(high), 1/sqrt(high))
    std = 1.0 / np.sqrt(high)
    x = jax.random.normal(kx, (B, N, low), dtype=jnp.float32)
    wq = jax.random.uniform(kq, (H, low, low), jnp.float32, -std, std)
    wk = jax.random.uniform(kk, (H, low, high), jnp.float32, -std, std)
    wv = jax.random.uniform(kv, (H, low, low), jnp.float32, -std, std)

    # deterministic linkage pattern (low, high): ~2/3 of entries "linked"
    ii = np.arange(low)[:, None]
    jj = np.arange(high)[None, :]
    linkage = jnp.asarray(((ii + jj) % 3 != 0).astype(np.float32))

    # nn.Linear(high*H, high) default-style deterministic init
    ostd = 1.0 / np.sqrt(high * H)
    out_w = jax.random.uniform(kw, (high, high * H), jnp.float32, -ostd, ostd)
    out_b = jax.random.uniform(kb, (high,), jnp.float32, -ostd, ostd)

    out = dis_attention(x, wq, wk, wv, linkage, out_w, out_b)
    out = jax.block_until_ready(out)
    assert out.shape == (B, N, high)

    ref = _reference(x, wq, wk, wv, linkage, out_w, out_b)
    np.testing.assert_allclose(np.asarray(out), np.asarray(ref),
                               atol=2e-2, rtol=2e-2)
    print("KERNEL_OK")
</pallas_src>

<mosaic_0001>
module attributes {stable_mosaic.version = 11 : i64} {
  func.func @_dis_attention_kernel(%arg0: i32, %arg1: memref<1x8x8xf32, #tpu.memory_space<vmem>>, %arg2: memref<8x16xf32, #tpu.memory_space<vmem>>, %arg3: memref<8x32xf32, #tpu.memory_space<vmem>>, %arg4: memref<16x8xf32, #tpu.memory_space<vmem>>, %arg5: memref<32x16xf32, #tpu.memory_space<vmem>>, %arg6: memref<16x32xf32, #tpu.memory_space<vmem>>, %arg7: memref<16x32xf32, #tpu.memory_space<vmem>>, %arg8: memref<16x1xf32, #tpu.memory_space<vmem>>, %arg9: memref<1x16x8xf32, #tpu.memory_space<vmem>>) attributes {dimension_semantics = [#tpu.dimension_semantics<parallel>], iteration_bounds = array<i64: 2>, scalar_prefetch = 0 : i64, scratch_operands = 0 : i64, tpu.core_type = #tpu.core_type<tc>, window_params = [{transform_indices = @transform_0, window_bounds = array<i64: 1, 8, 8>}, {pipeline_mode = #tpu.pipeline_mode<synchronous>, transform_indices = @transform_1, window_bounds = array<i64: 8, 16>}, {pipeline_mode = #tpu.pipeline_mode<synchronous>, transform_indices = @transform_2, window_bounds = array<i64: 8, 32>}, {pipeline_mode = #tpu.pipeline_mode<synchronous>, transform_indices = @transform_3, window_bounds = array<i64: 16, 8>}, {pipeline_mode = #tpu.pipeline_mode<synchronous>, transform_indices = @transform_4, window_bounds = array<i64: 32, 16>}, {pipeline_mode = #tpu.pipeline_mode<synchronous>, transform_indices = @transform_5, window_bounds = array<i64: 16, 32>}, {pipeline_mode = #tpu.pipeline_mode<synchronous>, transform_indices = @transform_6, window_bounds = array<i64: 16, 32>}, {pipeline_mode = #tpu.pipeline_mode<synchronous>, transform_indices = @transform_7, window_bounds = array<i64: 16, 1>}, {transform_indices = @transform_8, window_bounds = array<i64: 1, 16, 8>}]} {
    %c0 = arith.constant 0 : index
    %c0_0 = arith.constant 0 : index
    %0 = vector.load %arg6[%c0, %c0_0] : memref<16x32xf32, #tpu.memory_space<vmem>>, vector<16x32xf32>
    %cst = arith.constant 0.000000e+00 : f32
    %1 = vector.broadcast %cst : f32 to vector<16x32xf32>
    %2 = arith.cmpf ogt, %0, %1 : vector<16x32xf32>
    %c0_1 = arith.constant 0 : index
    %c0_2 = arith.constant 0 : index
    %3 = vector.load %arg7[%c0_1, %c0_2] : memref<16x32xf32, #tpu.memory_space<vmem>>, vector<16x32xf32>
    %c0_3 = arith.constant 0 : index
    %c0_4 = arith.constant 0 : index
    %4 = vector.load %arg2[%c0_3, %c0_4] : memref<8x16xf32, #tpu.memory_space<vmem>>, vector<8x16xf32>
    %5 = arith.truncf %4 : vector<8x16xf32> to vector<8x16xbf16>
    %c0_5 = arith.constant 0 : index
    %c0_6 = arith.constant 0 : index
    %6 = vector.load %arg3[%c0_5, %c0_6] : memref<8x32xf32, #tpu.memory_space<vmem>>, vector<8x32xf32>
    %7 = arith.truncf %6 : vector<8x32xf32> to vector<8x32xbf16>
    %c0_7 = arith.constant 0 : index
    %c0_8 = arith.constant 0 : index
    %8 = vector.load %arg4[%c0_7, %c0_8] : memref<16x8xf32, #tpu.memory_space<vmem>>, vector<16x8xf32>
    %9 = arith.truncf %8 : vector<16x8xf32> to vector<16x8xbf16>
    %c0_9 = arith.constant 0 : index
    %c0_10 = arith.constant 0 : index
    %10 = vector.load %arg5[%c0_9, %c0_10] : memref<32x16xf32, #tpu.memory_space<vmem>>, vector<32x16xf32>
    %11 = arith.truncf %10 : vector<32x16xf32> to vector<32x16xbf16>
    %c0_11 = arith.constant 0 : index
    %c0_12 = arith.constant 0 : index
    %c0_13 = arith.constant 0 : index
    %12 = vector.load %arg1[%c0_11, %c0_12, %c0_13] : memref<1x8x8xf32, #tpu.memory_space<vmem>>, vector<1x8x8xf32>
    %13 = arith.truncf %12 : vector<1x8x8xf32> to vector<1x8x8xbf16>
    %cst_14 = arith.constant dense<0.000000e+00> : vector<1x8x8xf32>
    %14 = tpu.matmul %13, %13, %cst_14 {dimension_numbers = #tpu.dot_dimension_numbers<[2], [2], [1], [1], [0, 0, 0, 1, 1, 1], [0], [0]>} : vector<1x8x8xbf16>, vector<1x8x8xbf16>, vector<1x8x8xf32> -> vector<1x8x8xf32>
    %15 = vector.shape_cast %14 : vector<1x8x8xf32> to vector<8x8xf32>
    %16 = arith.truncf %15 : vector<8x8xf32> to vector<8x8xbf16>
    %cst_15 = arith.constant dense<0.000000e+00> : vector<8x16xf32>
    %17 = tpu.matmul %16, %5, %cst_15 {dimension_numbers = #tpu.dot_dimension_numbers<[1], [0], [0], [1], [0, 0, 1, 1], [], []>} : vector<8x8xbf16>, vector<8x16xbf16>, vector<8x16xf32> -> vector<8x16xf32>
    %18 = vector.shape_cast %17 : vector<8x16xf32> to vector<1x8x16xf32>
    %19 = tpu.transpose %18, [0, 2, 1] : vector<1x8x16xf32> -> vector<1x16x8xf32>
    %20 = vector.shape_cast %19 : vector<1x16x8xf32> to vector<16x8xf32>
    %21 = arith.truncf %20 : vector<16x8xf32> to vector<16x8xbf16>
    %cst_16 = arith.constant dense<0.000000e+00> : vector<16x32xf32>
    %22 = tpu.matmul %21, %7, %cst_16 {dimension_numbers = #tpu.dot_dimension_numbers<[1], [0], [0], [1], [0, 0, 1, 1], [], []>} : vector<16x8xbf16>, vector<8x32xbf16>, vector<16x32xf32> -> vector<16x32xf32>
    %23 = vector.shape_cast %22 : vector<16x32xf32> to vector<1x16x32xf32>
    %cst_17 = arith.constant 2.500000e-01 : f32
    %24 = vector.broadcast %cst_17 : f32 to vector<1x16x32xf32>
    %25 = arith.mulf %23, %24 : vector<1x16x32xf32>
    %cst_18 = arith.constant 9.000000e+15 : f32
    %26 = vector.shape_cast %2 : vector<16x32xi1> to vector<1x16x32xi1>
    %27 = vector.broadcast %cst_18 : f32 to vector<1x16x32xf32>
    %28 = arith.select %26, %25, %27 : vector<1x16x32xi1>, vector<1x16x32xf32>
    %cst_19 = arith.constant -9.000000e+15 : f32
    %29 = vector.shape_cast %2 : vector<16x32xi1> to vector<1x16x32xi1>
    %30 = vector.broadcast %cst_19 : f32 to vector<1x16x32xf32>
    %31 = arith.select %29, %25, %30 : vector<1x16x32xi1>, vector<1x16x32xf32>
    %cst_20 = arith.constant dense<0x7F800000> : vector<1x16xf32>
    %32 = vector.multi_reduction <minimumf>, %28, %cst_20 [2] : vector<1x16x32xf32> to vector<1x16xf32>
    %33 = vector.shape_cast %32 : vector<1x16xf32> to vector<1x16x1xf32>
    %cst_21 = arith.constant dense<0xFF800000> : vector<1x16xf32>
    %34 = vector.multi_reduction <maximumf>, %31, %cst_21 [2] : vector<1x16x32xf32> to vector<1x16xf32>
    %35 = vector.shape_cast %34 : vector<1x16xf32> to vector<1x16x1xf32>
    %36 = arith.subf %35, %33 : vector<1x16x1xf32>
    %cst_22 = arith.constant 0.000000e+00 : f32
    %37 = vector.broadcast %cst_22 : f32 to vector<1x16x1xf32>
    %38 = arith.cmpf oeq, %36, %37 : vector<1x16x1xf32>
    %cst_23 = arith.constant 9.99999997E-7 : f32
    %39 = vector.broadcast %cst_23 : f32 to vector<1x16x1xf32>
    %40 = arith.select %38, %39, %36 : vector<1x16x1xi1>, vector<1x16x1xf32>
    %41 = vector.broadcast %33 : vector<1x16x1xf32> to vector<1x16x32xf32>
    %42 = arith.subf %25, %41 : vector<1x16x32xf32>
    %43 = tpu.reciprocal %40 {approx = true} : vector<1x16x1xf32> -> vector<1x16x1xf32>
    %44 = vector.broadcast %43 : vector<1x16x1xf32> to vector<1x16x32xf32>
    %45 = arith.mulf %42, %44 : vector<1x16x32xf32>
    %46 = vector.shape_cast %2 : vector<16x32xi1> to vector<1x16x32xi1>
    %47 = vector.shape_cast %3 : vector<16x32xf32> to vector<1x16x32xf32>
    %48 = arith.select %46, %45, %47 : vector<1x16x32xi1>, vector<1x16x32xf32>
    %cst_24 = arith.constant dense<0xFF800000> : vector<1x16xf32>
    %49 = vector.multi_reduction <maximumf>, %48, %cst_24 [2] : vector<1x16x32xf32> to vector<1x16xf32>
    %50 = vector.shape_cast %49 : vector<1x16xf32> to vector<1x16x1xf32>
    %51 = vector.broadcast %50 : vector<1x16x1xf32> to vector<1x16x32xf32>
    %52 = arith.subf %48, %51 : vector<1x16x32xf32>
    %53 = math.exp %52 : vector<1x16x32xf32>
    %cst_25 = arith.constant dense<0.000000e+00> : vector<1x16xf32>
    %54 = vector.multi_reduction <add>, %53, %cst_25 [2] : vector<1x16x32xf32> to vector<1x16xf32>
    %55 = vector.shape_cast %54 : vector<1x16xf32> to vector<1x16x1xf32>
    %56 = tpu.reciprocal %55 {approx = true} : vector<1x16x1xf32> -> vector<1x16x1xf32>
    %57 = vector.broadcast %56 : vector<1x16x1xf32> to vector<1x16x32xf32>
    %58 = arith.mulf %53, %57 : vector<1x16x32xf32>
    %59 = vector.shape_cast %58 : vector<1x16x32xf32> to vector<16x32xf32>
    %60 = arith.truncf %59 : vector<16x32xf32> to vector<16x32xbf16>
    %cst_26 = arith.constant dense<0.000000e+00> : vector<16x16xf32>
    %61 = tpu.matmul %60, %11, %cst_26 {dimension_numbers = #tpu.dot_dimension_numbers<[1], [0], [0], [1], [0, 0, 1, 1], [], []>} : vector<16x32xbf16>, vector<32x16xbf16>, vector<16x16xf32> -> vector<16x16xf32>
    %62 = vector.shape_cast %61 : vector<16x16xf32> to vector<1x16x16xf32>
    %63 = tpu.transpose %62, [0, 2, 1] : vector<1x16x16xf32> -> vector<1x16x16xf32>
    %64 = vector.shape_cast %63 : vector<1x16x16xf32> to vector<16x16xf32>
    %65 = arith.truncf %64 : vector<16x16xf32> to vector<16x16xbf16>
    %cst_27 = arith.constant dense<0.000000e+00> : vector<16x8xf32>
    %66 = tpu.matmul %65, %9, %cst_27 {dimension_numbers = #tpu.dot_dimension_numbers<[1], [0], [0], [1], [0, 0, 1, 1], [], []>} : vector<16x16xbf16>, vector<16x8xbf16>, vector<16x8xf32> -> vector<16x8xf32>
    %67 = vector.shape_cast %66 : vector<16x8xf32> to vector<1x16x8xf32>
    %68 = arith.truncf %67 : vector<1x16x8xf32> to vector<1x16x8xbf16>
    %cst_28 = arith.constant dense<0.000000e+00> : vector<1x16x8xf32>
    %69 = tpu.matmul %68, %13, %cst_28 {dimension_numbers = #tpu.dot_dimension_numbers<[2], [1], [1], [2], [0, 0, 0, 1, 1, 2], [0], [0]>} : vector<1x16x8xbf16>, vector<1x8x8xbf16>, vector<1x16x8xf32> -> vector<1x16x8xf32>
    %c0_29 = arith.constant 0 : index
    %c0_30 = arith.constant 0 : index
    %70 = vector.load %arg8[%c0_29, %c0_30] : memref<16x1xf32, #tpu.memory_space<vmem>>, vector<16x1xf32>
    %71 = vector.shape_cast %70 : vector<16x1xf32> to vector<1x16x1xf32>
    %72 = vector.broadcast %71 : vector<1x16x1xf32> to vector<1x16x8xf32>
    %73 = arith.addf %69, %72 : vector<1x16x8xf32>
    %c0_31 = arith.constant 0 : index
    %c0_32 = arith.constant 0 : index
    %c0_33 = arith.constant 0 : index
    %74 = vector.load %arg9[%c0_31, %c0_32, %c0_33] : memref<1x16x8xf32, #tpu.memory_space<vmem>>, vector<1x16x8xf32>
    tpu.vector_store %arg9[%c0_31, %c0_32, %c0_33], %73 {strides = array<i32>} : memref<1x16x8xf32, #tpu.memory_space<vmem>>, vector<1x16x8xf32>,
    return
  }
  func.func @transform_0(%arg0: i32) -> (i32, i32, i32) {
    %c0_i32 = arith.constant 0 : i32
    %c0_i32_0 = arith.constant 0 : i32
    %c0_i32_1 = arith.constant 0 : i32
    return %arg0, %c0_i32, %c0_i32_0 : i32, i32, i32
  }
  func.func @transform_1(%arg0: i32) -> (i32, i32) {
    %c0_i32 = arith.constant 0 : i32
    %c0_i32_0 = arith.constant 0 : i32
    %c0_i32_1 = arith.constant 0 : i32
    return %c0_i32, %c0_i32_0 : i32, i32
  }
  func.func @transform_2(%arg0: i32) -> (i32, i32) {
    %c0_i32 = arith.constant 0 : i32
    %c0_i32_0 = arith.constant 0 : i32
    %c0_i32_1 = arith.constant 0 : i32
    return %c0_i32, %c0_i32_0 : i32, i32
  }
  func.func @transform_3(%arg0: i32) -> (i32, i32) {
    %c0_i32 = arith.constant 0 : i32
    %c0_i32_0 = arith.constant 0 : i32
    %c0_i32_1 = arith.constant 0 : i32
    return %c0_i32, %c0_i32_0 : i32, i32
  }
  func.func @transform_4(%arg0: i32) -> (i32, i32) {
    %c0_i32 = arith.constant 0 : i32
    %c0_i32_0 = arith.constant 0 : i32
    %c0_i32_1 = arith.constant 0 : i32
    return %c0_i32, %c0_i32_0 : i32, i32
  }
  func.func @transform_5(%arg0: i32) -> (i32, i32) {
    %c0_i32 = arith.constant 0 : i32
    %c0_i32_0 = arith.constant 0 : i32
    %c0_i32_1 = arith.constant 0 : i32
    return %c0_i32, %c0_i32_0 : i32, i32
  }
  func.func @transform_6(%arg0: i32) -> (i32, i32) {
    %c0_i32 = arith.constant 0 : i32
    %c0_i32_0 = arith.constant 0 : i32
    %c0_i32_1 = arith.constant 0 : i32
    return %c0_i32, %c0_i32_0 : i32, i32
  }
  func.func @transform_7(%arg0: i32) -> (i32, i32) {
    %c0_i32 = arith.constant 0 : i32
    %c0_i32_0 = arith.constant 0 : i32
    %c0_i32_1 = arith.constant 0 : i32
    return %c0_i32, %c0_i32_0 : i32, i32
  }
  func.func @transform_8(%arg0: i32) -> (i32, i32, i32) {
    %c0_i32 = arith.constant 0 : i32
    %c0_i32_0 = arith.constant 0 : i32
    %c0_i32_1 = arith.constant 0 : i32
    return %arg0, %c0_i32, %c0_i32_0 : i32, i32, i32
  }
}

</mosaic_0001>

<llo_original>
// kernel: dis_attention.1
$region0: #{dis_attention.1}
  #allocation0 [shape = 'u32[]', space=smem, size = 0x4, offset = 0x4, fixed_abs, tag = 'smem constant byte address 0x4 - core index']
  #allocation1 [shape = 'u32[144,128]{1,0:T(1,128)}', space=vmem, size = 0x12000, scoped, tag = 'internal scratch']
  %s0 = inlined_call_operand.vmem [shape: f32[2,8,8], index: 0, kind: input, shape index: {}]
  %s1 = inlined_call_operand.vmem [shape: f32[8,16], index: 1, kind: input, shape index: {}]
  %s2 = inlined_call_operand.vmem [shape: f32[8,32], index: 2, kind: input, shape index: {}]
  %s3 = inlined_call_operand.vmem [shape: f32[16,8], index: 3, kind: input, shape index: {}]
  %s4 = inlined_call_operand.vmem [shape: f32[32,16], index: 4, kind: input, shape index: {}]
  %s5 = inlined_call_operand.vmem [shape: f32[16,32], index: 5, kind: input, shape index: {}]
  %s6 = inlined_call_operand.vmem [shape: f32[16,32], index: 6, kind: input, shape index: {}]
  %s7 = inlined_call_operand.vmem [shape: f32[16,1], index: 7, kind: input, shape index: {}]
  %s8 = inlined_call_operand.vmem [shape: f32[2,16,8], index: 8, kind: output, shape index: {}]
  %s9 = sld [smem:[#allocation0]]
  $region65: #{dis_attention.1} parent=0
    _
  %s11 = ssub.s32 1, %s9
  %s12 = scalar_select 0, %s11, %s9
  loop: start=0, step=1, limit=4
  $region2: #{dis_attention.1} parent=0 // loop_pre_header
    _
  $region3: #{dis_attention.1} parent=0 // loop_header
    %s14 = sphi 0, %s18
    %p15 = scmp.ge.s32.totalorder %s14, 4
    %s24 = sphi 0, %s26
    %s27 = sphi 0, %s24
    %s28 = sphi 0, %s27
    %s44 = sphi 0, %s28
    %s48 = sphi 0, %s48
    %s50 = sphi 0, %s48
    %s51 = sphi 0, %s50
    %s65 = sphi 0, %s51
    %s69 = sphi 0, %s69
    %s71 = sphi 0, %s69
    %s72 = sphi 0, %s71
    %s86 = sphi 0, %s72
    %s90 = sphi 0, %s90
    %s92 = sphi 0, %s90
    %s93 = sphi 0, %s92
    %s107 = sphi 0, %s93
    %s111 = sphi 0, %s111
    %s113 = sphi 0, %s111
    %s114 = sphi 0, %s113
    %s128 = sphi 0, %s114
    %s132 = sphi 0, %s132
    %s134 = sphi 0, %s132
    %s135 = sphi 0, %s134
    %s149 = sphi 0, %s135
    %s153 = sphi 0, %s153
    %s155 = sphi 0, %s153
    %s156 = sphi 0, %s155
    %s170 = sphi 0, %s156
    %s174 = sphi 0, %s174
    %s176 = sphi 0, %s174
    %s177 = sphi 0, %s176
    %s191 = sphi 0, %s177
    %s197 = sphi 0, %s199
    %s200 = sphi 0, %s197
    %s201 = sphi 0, %s200
    %s217 = sphi 0, %s201
  $region4: #{dis_attention.1} parent=0 // loop_header_branch
    %17 = sbr.rel (%p15) target = $region8
  $region5: #{dis_attention.1} parent=0 // loop_body
    %s19 = ssub.s32 %s14, 1
    %s20 = ssub.s32 %s14, 2
    %s21 = sadd.s32 %s14, 1
    %s22 = ssub.s32 %s14, %s21
    %p23 = scmp.eq.s32.totalorder %s22, 0
    %s25 = sadd.s32 %s24, 1
    %s26 = scalar_select %p23, %s24, %s25
    %p29 = pneg %p23
    %p30 = scmp.eq.s32.totalorder %s14, 1
    %p31 = por %p29, %p30
    %p32 = scmp.ne.s32.totalorder %s24, %s27
    %p33 = scmp.eq.s32.totalorder %s14, 0
    %p34 = por %p32, %p33
    %p35 = scmp.ne.s32.totalorder %s24, %s27
    %p36 = scmp.eq.s32.totalorder %s19, 1
    %p37 = por %p35, %p36
    %p38 = scmp.ne.s32.totalorder %s27, %s28
    %p39 = scmp.eq.s32.totalorder %s19, 0
    %p40 = por %p38, %p39
    %p41 = scmp.ne.s32.totalorder %s27, %s28
    %p42 = scmp.eq.s32.totalorder %s20, 1
    %p43 = por %p41, %p42
    %p45 = scmp.ne.s32.totalorder %s28, %s44
    %p46 = scmp.eq.s32.totalorder %s20, 0
    %p47 = por %p45, %p46
    %s49 = sadd.s32 %s48, 1
    %p52 = scmp.eq.s32.totalorder %s14, 1
    %p53 = scmp.ne.s32.totalorder %s48, %s50
    %p54 = scmp.eq.s32.totalorder %s14, 0
    %p55 = por %p53, %p54
    %p56 = scmp.ne.s32.totalorder %s48, %s50
    %p57 = scmp.eq.s32.totalorder %s19, 1
    %p58 = por %p56, %p57
    %p59 = scmp.ne.s32.totalorder %s50, %s51
    %p60 = scmp.eq.s32.totalorder %s19, 0
    %p61 = por %p59, %p60
    %p62 = scmp.ne.s32.totalorder %s50, %s51
    %p63 = scmp.eq.s32.totalorder %s20, 1
    %p64 = por %p62, %p63
    %p66 = scmp.ne.s32.totalorder %s51, %s65
    %p67 = scmp.eq.s32.totalorder %s20, 0
    %p68 = por %p66, %p67
    %s70 = sadd.s32 %s69, 1
    %p73 = scmp.eq.s32.totalorder %s14, 1
    %p74 = scmp.ne.s32.totalorder %s69, %s71
    %p75 = scmp.eq.s32.totalorder %s14, 0
    %p76 = por %p74, %p75
    %p77 = scmp.ne.s32.totalorder %s69, %s71
    %p78 = scmp.eq.s32.totalorder %s19, 1
    %p79 = por %p77, %p78
    %p80 = scmp.ne.s32.totalorder %s71, %s72
    %p81 = scmp.eq.s32.totalorder %s19, 0
    %p82 = por %p80, %p81
    %p83 = scmp.ne.s32.totalorder %s71, %s72
    %p84 = scmp.eq.s32.totalorder %s20, 1
    %p85 = por %p83, %p84
    %p87 = scmp.ne.s32.totalorder %s72, %s86
    %p88 = scmp.eq.s32.totalorder %s20, 0
    %p89 = por %p87, %p88
    %s91 = sadd.s32 %s90, 1
    %p94 = scmp.eq.s32.totalorder %s14, 1
    %p95 = scmp.ne.s32.totalorder %s90, %s92
    %p96 = scmp.eq.s32.totalorder %s14, 0
    %p97 = por %p95, %p96
    %p98 = scmp.ne.s32.totalorder %s90, %s92
    %p99 = scmp.eq.s32.totalorder %s19, 1
    %p100 = por %p98, %p99
    %p101 = scmp.ne.s32.totalorder %s92, %s93
    %p102 = scmp.eq.s32.totalorder %s19, 0
    %p103 = por %p101, %p102
    %p104 = scmp.ne.s32.totalorder %s92, %s93
    %p105 = scmp.eq.s32.totalorder %s20, 1
    %p106 = por %p104, %p105
    %p108 = scmp.ne.s32.totalorder %s93, %s107
    %p109 = scmp.eq.s32.totalorder %s20, 0
    %p110 = por %p108, %p109
    %s112 = sadd.s32 %s111, 1
    %p115 = scmp.eq.s32.totalorder %s14, 1
    %p116 = scmp.ne.s32.totalorder %s111, %s113
    %p117 = scmp.eq.s32.totalorder %s14, 0
    %p118 = por %p116, %p117
    %p119 = scmp.ne.s32.totalorder %s111, %s113
    %p120 = scmp.eq.s32.totalorder %s19, 1
    %p121 = por %p119, %p120
    %p122 = scmp.ne.s32.totalorder %s113, %s114
    %p123 = scmp.eq.s32.totalorder %s19, 0
    %p124 = por %p122, %p123
    %p125 = scmp.ne.s32.totalorder %s113, %s114
    %p126 = scmp.eq.s32.totalorder %s20, 1
    %p127 = por %p125, %p126
    %p129 = scmp.ne.s32.totalorder %s114, %s128
    %p130 = scmp.eq.s32.totalorder %s20, 0
    %p131 = por %p129, %p130
    %s133 = sadd.s32 %s132, 1
    %p136 = scmp.eq.s32.totalorder %s14, 1
    %p137 = scmp.ne.s32.totalorder %s132, %s134
    %p138 = scmp.eq.s32.totalorder %s14, 0
    %p139 = por %p137, %p138
    %p140 = scmp.ne.s32.totalorder %s132, %s134
    %p141 = scmp.eq.s32.totalorder %s19, 1
    %p142 = por %p140, %p141
    %p143 = scmp.ne.s32.totalorder %s134, %s135
    %p144 = scmp.eq.s32.totalorder %s19, 0
    %p145 = por %p143, %p144
    %p146 = scmp.ne.s32.totalorder %s134, %s135
    %p147 = scmp.eq.s32.totalorder %s20, 1
    %p148 = por %p146, %p147
    %p150 = scmp.ne.s32.totalorder %s135, %s149
    %p151 = scmp.eq.s32.totalorder %s20, 0
    %p152 = por %p150, %p151
    %s154 = sadd.s32 %s153, 1
    %p157 = scmp.eq.s32.totalorder %s14, 1
    %p158 = scmp.ne.s32.totalorder %s153, %s155
    %p159 = scmp.eq.s32.totalorder %s14, 0
    %p160 = por %p158, %p159
    %p161 = scmp.ne.s32.totalorder %s153, %s155
    %p162 = scmp.eq.s32.totalorder %s19, 1
    %p163 = por %p161, %p162
    %p164 = scmp.ne.s32.totalorder %s155, %s156
    %p165 = scmp.eq.s32.totalorder %s19, 0
    %p166 = por %p164, %p165
    %p167 = scmp.ne.s32.totalorder %s155, %s156
    %p168 = scmp.eq.s32.totalorder %s20, 1
    %p169 = por %p167, %p168
    %p171 = scmp.ne.s32.totalorder %s156, %s170
    %p172 = scmp.eq.s32.totalorder %s20, 0
    %p173 = por %p171, %p172
    %s175 = sadd.s32 %s174, 1
    %p178 = scmp.eq.s32.totalorder %s14, 1
    %p179 = scmp.ne.s32.totalorder %s174, %s176
    %p180 = scmp.eq.s32.totalorder %s14, 0
    %p181 = por %p179, %p180
    %p182 = scmp.ne.s32.totalorder %s174, %s176
    %p183 = scmp.eq.s32.totalorder %s19, 1
    %p184 = por %p182, %p183
    %p185 = scmp.ne.s32.totalorder %s176, %s177
    %p186 = scmp.eq.s32.totalorder %s19, 0
    %p187 = por %p185, %p186
    %p188 = scmp.ne.s32.totalorder %s176, %s177
    %p189 = scmp.eq.s32.totalorder %s20, 1
    %p190 = por %p188, %p189
    %p192 = scmp.ne.s32.totalorder %s177, %s191
    %p193 = scmp.eq.s32.totalorder %s20, 0
    %p194 = por %p192, %p193
    %s195 = ssub.s32 %s14, %s21
    %p196 = scmp.eq.s32.totalorder %s195, 0
    %s198 = sadd.s32 %s197, 1
    %s199 = scalar_select %p196, %s197, %s198
    %p202 = pneg %p196
    %p203 = scmp.eq.s32.totalorder %s14, 1
    %p204 = por %p202, %p203
    %p205 = scmp.ne.s32.totalorder %s197, %s200
    %p206 = scmp.eq.s32.totalorder %s14, 0
    %p207 = por %p205, %p206
    %p208 = scmp.ne.s32.totalorder %s197, %s200
    %p209 = scmp.eq.s32.totalorder %s19, 1
    %p210 = por %p208, %p209
    %p211 = scmp.ne.s32.totalorder %s200, %s201
    %p212 = scmp.eq.s32.totalorder %s19, 0
    %p213 = por %p211, %p212
    %p214 = scmp.ne.s32.totalorder %s200, %s201
    %p215 = scmp.eq.s32.totalorder %s20, 1
    %p216 = por %p214, %p215
    %p218 = scmp.ne.s32.totalorder %s201, %s217
    %p219 = scmp.eq.s32.totalorder %s20, 0
    %p220 = por %p218, %p219
    %p221 = scmp.le.s32.totalorder 1, %s14
    %p222 = scmp.lt.s32.totalorder %s14, 3
    %p223 = pnand %p221, %p222
    %p224 = pneg %p223
    // Predicated region
    $region9: #{dis_attention.1} parent=5 // pred_check
      _
    $region10: #{dis_attention.1} parent=5 // pred_check_branch
      %226 = sbr.rel (%p223) target = $region12
    $region11: #{dis_attention.1} parent=5 // pred_region
      %s227 = ssub.s32 %s14, 1
      // Predicated region
      $region13: #{dis_attention.1} parent=11 // pred_check
        %p228 = pneg %p61
      $region14: #{dis_attention.1} parent=11 // pred_check_branch
        %230 = sbr.rel (%p228) target = $region16
      $region15: #{dis_attention.1} parent=11 // pred_region
        _
      $region16: #{dis_attention.1} parent=11 // pred_fallthru
        _
      // Predicated region
      $region17: #{dis_attention.1} parent=11 // pred_check
        %p231 = pneg %p82
      $region18: #{dis_attention.1} parent=11 // pred_check_branch
        %233 = sbr.rel (%p231) target = $region20
      $region19: #{dis_attention.1} parent=11 // pred_region
        _
      $region20: #{dis_attention.1} parent=11 // pred_fallthru
        _
      // Predicated region
      $region21: #{dis_attention.1} parent=11 // pred_check
        %p234 = pneg %p103
      $region22: #{dis_attention.1} parent=11 // pred_check_branch
        %236 = sbr.rel (%p234) target = $region24
      $region23: #{dis_attention.1} parent=11 // pred_region
        _
      $region24: #{dis_attention.1} parent=11 // pred_fallthru
        _
      // Predicated region
      $region25: #{dis_attention.1} parent=11 // pred_check
        %p237 = pneg %p124
      $region26: #{dis_attention.1} parent=11 // pred_check_branch
        %239 = sbr.rel (%p237) target = $region28
      $region27: #{dis_attention.1} parent=11 // pred_region
        _
      $region28: #{dis_attention.1} parent=11 // pred_fallthru
        _
      // Predicated region
      $region29: #{dis_attention.1} parent=11 // pred_check
        %p240 = pneg %p145
      $region30: #{dis_attention.1} parent=11 // pred_check_branch
        %242 = sbr.rel (%p240) target = $region32
      $region31: #{dis_attention.1} parent=11 // pred_region
        _
      $region32: #{dis_attention.1} parent=11 // pred_fallthru
        _
      // Predicated region
      $region33: #{dis_attention.1} parent=11 // pred_check
        %p243 = pneg %p166
      $region34: #{dis_attention.1} parent=11 // pred_check_branch
        %245 = sbr.rel (%p243) target = $region36
      $region35: #{dis_attention.1} parent=11 // pred_region
        _
      $region36: #{dis_attention.1} parent=11 // pred_fallthru
        _
      // Predicated region
      $region37: #{dis_attention.1} parent=11 // pred_check
        %p246 = pneg %p187
      $region38: #{dis_attention.1} parent=11 // pred_check_branch
        %248 = sbr.rel (%p246) target = $region40
      $region39: #{dis_attention.1} parent=11 // pred_region
        _
      $region40: #{dis_attention.1} parent=11 // pred_fallthru
        _
    $region12: #{dis_attention.1} parent=5 // pred_fallthru
      _
    %p249 = scmp.lt.s32.totalorder %s14, 2
    // Predicated region
    $region41: #{dis_attention.1} parent=5 // pred_check
      %p250 = pneg %p249
    $region42: #{dis_attention.1} parent=5 // pred_check_branch
      %252 = sbr.rel (%p250) target = $region44
    $region43: #{dis_attention.1} parent=5 // pred_region
      // Predicated region
      $region45: #{dis_attention.1} parent=43 // pred_check
        %p253 = pneg %p34
      $region46: #{dis_attention.1} parent=43 // pred_check_branch
        %255 = sbr.rel (%p253) target = $region48
      $region47: #{dis_attention.1} parent=43 // pred_region
        %p256 = scmp.lt.s32.totalorder %s14, 1
        %s257 = scalar_select %p256, %s14, 1
        %s258 = smul.addr %s257, 8
        %s259 = scalar_lea.vmem %s0, %s258
      $region48: #{dis_attention.1} parent=43 // pred_fallthru
        _
    $region44: #{dis_attention.1} parent=5 // pred_fallthru
      _
    %p260 = scmp.le.s32.totalorder 1, %s14
    %p261 = scmp.lt.s32.totalorder %s14, 3
    %p262 = pnand %p260, %p261
    %p263 = pneg %p262
    // Predicated region
    $region49: #{dis_attention.1} parent=5 // pred_check
      _
    $region50: #{dis_attention.1} parent=5 // pred_check_branch
      %265 = sbr.rel (%p262) target = $region52
    $region51: #{dis_attention.1} parent=5 // pred_region
      %s266 = ssub.s32 %s14, 1
      %p267 = scmp.lt.s32.totalorder %s19, 1
      %s268 = scalar_select %p267, %s19, 1
      %s269 = smul.addr %s268, 8
      %s270 = scalar_lea.vmem %s0, %s269
      %p271 = pneg %p40
      %p272 = pneg %p37
      %p273 = pneg %p61
      %p274 = pneg %p58
      %p275 = pneg %p82
      %p276 = pneg %p79
      %p277 = pneg %p103
      %p278 = pneg %p100
      %p279 = pneg %p124
      %p280 = pneg %p121
      %p281 = pneg %p145
      %p282 = pneg %p142
      %p283 = pneg %p166
      %p284 = pneg %p163
      %p285 = pneg %p187
      %p286 = pneg %p184
      %p287 = pneg %p213
      %p288 = pneg %p210
      %p289 = scmp.lt.s32.totalorder %s19, 1
      %s290 = scalar_select %p289, %s19, 1
      %s291 = smul.addr %s290, 2
      %s292 = smul.addr %s291, 8
      %s293 = scalar_lea.vmem %s8, %s292
      %p294 = scmp.lt.s32.totalorder %s19, 1
      %s295 = scalar_select %p294, %s19, 1
      %s296 = smul.addr %s295, 8
      %s297 = scalar_lea.vmem %s0, %s296
      %p298 = scmp.lt.s32.totalorder %s19, 1
      %s299 = scalar_select %p298, %s19, 1
      %s300 = smul.addr %s299, 2
      %s301 = smul.addr %s300, 8
      %s302 = scalar_lea.vmem %s8, %s301
      %v304 = vld [vmem:[%s5] sm:$0xff]
      %v305 = vld [vmem:[%s5 + $0x8] sm:$0xff]
      %vm306 = vcmp.gt.f32.partialorder %v304, 0.0
      %vm307 = vcmp.gt.f32.partialorder %v305, 0.0
      %v308 = vld [vmem:[%s6] sm:$0xff]
      %v309 = vld [vmem:[%s6 + $0x8] sm:$0xff]
      %v310 = vld [vmem:[%s1] sm:$0xff]
      %v311 = vpack.c.bf16 %v310, %v310
      %v312 = vld [vmem:[%s2] sm:$0xff]
      %v313 = vpack.c.bf16 %v312, %v312
      %v314 = vld [vmem:[%s3] sm:$0xff]
      %v315 = vld [vmem:[%s3 + $0x8] sm:$0xff]
      %v316 = vpack.c.bf16 %v315, %v314
      %v317 = vld [vmem:[%s4] sm:$0xff]
      %v318 = vld [vmem:[%s4 + $0x8] sm:$0xff]
      %v319 = vld [vmem:[%s4 + $0x10] sm:$0xff]
      %v320 = vld [vmem:[%s4 + $0x18] sm:$0xff]
      %v321 = vpack.c.bf16 %v318, %v317
      %v322 = vpack.c.bf16 %v320, %v319
      %v323 = vld [vmem:[%s297] sm:$0xff]
      %v324 = vpack.c.bf16 %v323, %v323
      %vm325 = vcmask 64512
      %v327 = vsel %vm325, %v324, 0
      %329 = vmatprep.subr.bf16.mxu0 0
      %330 = vmatpush1.bf16.xpose.msra.mxu0 %v327
      %331 = vmatprep.subr.bf16.mxu0 0
      %332 = vmatpush1.bf16.xpose.msra.mxu0 0
      %333 = vmatprep.subr.bf16.mxu0 0
      %334 = vmatpush1.bf16.xpose.msra.mxu0 0
      %335 = vmatprep.subr.bf16.mxu0 0
      %336 = vmatpush1.bf16.xpose.msra.mxu0 0
      %337 = vmatprep.subr.bf16.mxu0 0
      %338 = vmatpush1.bf16.xpose.msra.mxu0 0
      %339 = vmatprep.subr.bf16.mxu0 0
      %340 = vmatpush1.bf16.xpose.msra.mxu0 0
      %341 = vmatprep.subr.bf16.mxu0 0
      %342 = vmatpush1.bf16.xpose.msra.mxu0 0
      %343 = vmatprep.subr.bf16.mxu0 0
      %344 = vmatpush1.bf16.xpose.msra.mxu0 0
      %345 = vmatprep.subr.bf16.mxu0 0
      %346 = vmatpush1.bf16.xpose.msra.mxu0 0
      %347 = vmatprep.subr.bf16.mxu0 0
      %348 = vmatpush1.bf16.xpose.msra.mxu0 0
      %349 = vmatprep.subr.bf16.mxu0 0
      %350 = vmatpush1.bf16.xpose.msra.mxu0 0
      %351 = vmatprep.subr.bf16.mxu0 0
      %352 = vmatpush1.bf16.xpose.msra.mxu0 0
      %353 = vmatprep.subr.bf16.mxu0 0
      %354 = vmatpush1.bf16.xpose.msra.mxu0 0
      %355 = vmatprep.subr.bf16.mxu0 0
      %356 = vmatpush1.bf16.xpose.msra.mxu0 0
      %357 = vmatprep.subr.bf16.mxu0 0
      %358 = vmatpush1.bf16.xpose.msra.mxu0 0
      %359 = vmatprep.subr.bf16.mxu0 0
      %360 = vmatpush1.bf16.xpose.msra.mxu0 0
      %361 = vmatprep.mubr.bf16.mxu0 0
      %362 = vmatmul.mubr.bf16.gmra.mrb[0].mxu0 %v327
      %v363 = vpop.f32.mrb[0].mxu0
      %v364 = vadd.f32 0.0, %v363
      %v365 = vpop.f32.mrb[0].mxu0
      %v366 = vpop.f32.mrb[0].mxu0
      %v367 = vpop.f32.mrb[0].mxu0
      %368 = vdwg.mxu0
      %v369 = vpack.c.bf16 %v364, %v364
      %v371 = vsel %vm325, %v369, 0
      %vm373 = vcmask 1043456
      %v375 = vsel %vm373, %v311, 0
      %377 = vmatprep.subr.bf16.mxu0 0
      %378 = vmatpush1.bf16.msra.mxu0 %v375
      %379 = vmatprep.subr.bf16.mxu0 0
      %380 = vmatpush1.bf16.msra.mxu0 0
      %381 = vmatprep.subr.bf16.mxu0 0
      %382 = vmatpush1.bf16.msra.mxu0 0
      %383 = vmatprep.subr.bf16.mxu0 0
      %384 = vmatpush1.bf16.msra.mxu0 0
      %385 = vmatprep.subr.bf16.mxu0 0
      %386 = vmatpush1.bf16.msra.mxu0 0
      %387 = vmatprep.subr.bf16.mxu0 0
      %388 = vmatpush1.bf16.msra.mxu0 0
      %389 = vmatprep.subr.bf16.mxu0 0
      %390 = vmatpush1.bf16.msra.mxu0 0
      %391 = vmatprep.subr.bf16.mxu0 0
      %392 = vmatpush1.bf16.msra.mxu0 0
      %393 = vmatprep.subr.bf16.mxu0 0
      %394 = vmatpush1.bf16.msra.mxu0 0
      %395 = vmatprep.subr.bf16.mxu0 0
      %396 = vmatpush1.bf16.msra.mxu0 0
      %397 = vmatprep.subr.bf16.mxu0 0
      %398 = vmatpush1.bf16.msra.mxu0 0
      %399 = vmatprep.subr.bf16.mxu0 0
      %400 = vmatpush1.bf16.msra.mxu0 0
      %401 = vmatprep.subr.bf16.mxu0 0
      %402 = vmatpush1.bf16.msra.mxu0 0
      %403 = vmatprep.subr.bf16.mxu0 0
      %404 = vmatpush1.bf16.msra.mxu0 0
      %405 = vmatprep.subr.bf16.mxu0 0
      %406 = vmatpush1.bf16.msra.mxu0 0
      %407 = vmatprep.subr.bf16.mxu0 0
      %408 = vmatpush1.bf16.msra.mxu0 0
      %409 = vmatprep.mubr.bf16.mxu0 0
      %410 = vmatmul.mubr.bf16.gmra.mrb[0].mxu0 %v371
      %v411 = vpop.f32.mrb[0].mxu0
      %v412 = vadd.f32 0.0, %v411
      %v413 = vpop.f32.mrb[0].mxu0
      %v414 = vpop.f32.mrb[0].mxu0
      %v415 = vpop.f32.mrb[0].mxu0
      %416 = vdwg.mxu0
      %417 = vxpose.xlu0.b32.start [1/16] %v412, 128
      %418 = vxpose.xlu0.b32.cont [2/16] 0.0, 128
      %419 = vxpose.xlu0.b32.cont [3/16] 0.0, 128
      %420 = vxpose.xlu0.b32.cont [4/16] 0.0, 128
      %421 = vxpose.xlu0.b32.cont [5/16] 0.0, 128
      %422 = vxpose.xlu0.b32.cont [6/16] 0.0, 128
      %423 = vxpose.xlu0.b32.cont [7/16] 0.0, 128
      %424 = vxpose.xlu0.b32.cont [8/16] 0.0, 128
      %425 = vxpose.xlu0.b32.cont [9/16] 0.0, 128
      %426 = vxpose.xlu0.b32.cont [10/16] 0.0, 128
      %427 = vxpose.xlu0.b32.cont [11/16] 0.0, 128
      %428 = vxpose.xlu0.b32.cont [12/16] 0.0, 128
      %429 = vxpose.xlu0.b32.cont [13/16] 0.0, 128
      %430 = vxpose.xlu0.b32.cont [14/16] 0.0, 128
      %431 = vxpose.xlu0.b32.cont [15/16] 0.0, 128
      %432 = vxpose.xlu0.b32.end [16/16] 0.0, 128
      %v433 = vpop.trf.xlu0
      %v434 = vpop.trf.xlu0
      %v435 = vpop.trf.xlu0
      %v436 = vpop.trf.xlu0
      %v437 = vpop.trf.xlu0
      %v438 = vpop.trf.xlu0
      %v439 = vpop.trf.xlu0
      %v440 = vpop.trf.xlu0
      %v441 = vpop.trf.xlu0
      %v442 = vpop.trf.xlu0
      %v443 = vpop.trf.xlu0
      %v444 = vpop.trf.xlu0
      %v445 = vpop.trf.xlu0
      %v446 = vpop.trf.xlu0
      %v447 = vpop.trf.xlu0
      %v448 = vpop.trf.xlu0
      %v449 = vpack.c.bf16 %v434, %v433
      %v451 = vsel %vm325, %v449, 0
      %v454 = vsel %vm373, %v313, 0
      %456 = vmatprep.subr.bf16.mxu0 0
      %457 = vmatpush1.bf16.msra.mxu0 %v454
      %458 = vmatprep.subr.bf16.mxu0 0
      %459 = vmatpush1.bf16.msra.mxu0 0
      %460 = vmatprep.subr.bf16.mxu0 0
      %461 = vmatpush1.bf16.msra.mxu0 0
      %462 = vmatprep.subr.bf16.mxu0 0
      %463 = vmatpush1.bf16.msra.mxu0 0
      %464 = vmatprep.subr.bf16.mxu0 0
      %465 = vmatpush1.bf16.msra.mxu0 0
      %466 = vmatprep.subr.bf16.mxu0 0
      %467 = vmatpush1.bf16.msra.mxu0 0
      %468 = vmatprep.subr.bf16.mxu0 0
      %469 = vmatpush1.bf16.msra.mxu0 0
      %470 = vmatprep.subr.bf16.mxu0 0
      %471 = vmatpush1.bf16.msra.mxu0 0
      %472 = vmatprep.subr.bf16.mxu0 0
      %473 = vmatpush1.bf16.msra.mxu0 0
      %474 = vmatprep.subr.bf16.mxu0 0
      %475 = vmatpush1.bf16.msra.mxu0 0
      %476 = vmatprep.subr.bf16.mxu0 0
      %477 = vmatpush1.bf16.msra.mxu0 0
      %478 = vmatprep.subr.bf16.mxu0 0
      %479 = vmatpush1.bf16.msra.mxu0 0
      %480 = vmatprep.subr.bf16.mxu0 0
      %481 = vmatpush1.bf16.msra.mxu0 0
      %482 = vmatprep.subr.bf16.mxu0 0
      %483 = vmatpush1.bf16.msra.mxu0 0
      %484 = vmatprep.subr.bf16.mxu0 0
      %485 = vmatpush1.bf16.msra.mxu0 0
      %486 = vmatprep.subr.bf16.mxu0 0
      %487 = vmatpush1.bf16.msra.mxu0 0
      %488 = vmatprep.mubr.bf16.mxu0 0
      %489 = vmatmul.mubr.bf16.gmra.mrb[0].mxu0 %v451
      %v490 = vpop.f32.mrb[0].mxu0
      %v491 = vadd.f32 0.0, %v490
      %v492 = vpop.f32.mrb[0].mxu0
      %v493 = vpop.f32.mrb[0].mxu0
      %v494 = vadd.f32 0.0, %v493
      %v495 = vpop.f32.mrb[0].mxu0
      %496 = vdwg.mxu0
      %v497 = vmul.f32 %v491, 0.25
      %v498 = vmul.f32 %v494, 0.25
      %v499 = vsel %vm306, %v497, 9e+15
      %v500 = vsel %vm307, %v498, 9e+15
      %v501 = vsel %vm306, %v497, -9e+15
      %v502 = vsel %vm307, %v498, -9e+15
      %vm503 = vcmask 261120
      %v504 = vsel %vm503, %v499, inf
      %505 = vmin.xlane.f32.xlu0 %v504
      %v506 = vpop.xlane.xlu0 %505
      %v507 = vsel %vm503, %v500, inf
      %508 = vmin.xlane.f32.xlu0 %v507
      %v509 = vpop.xlane.xlu0 %508
      %v510 = vsel %vm503, %v501, -inf
      %511 = vmax.xlane.f32.xlu0 %v510
      %v512 = vpop.xlane.xlu0 %511
      %v513 = vsel %vm503, %v502, -inf
      %514 = vmax.xlane.f32.xlu0 %v513
      %v515 = vpop.xlane.xlu0 %514
      %v516 = vsub.f32 %v512, %v506
      %v517 = vsub.f32 %v515, %v509
      %vm518 = vcmp.eq.f32.partialorder %v516, 0.0
      %vm519 = vcmp.eq.f32.partialorder %v517, 0.0
      %v520 = vsel %vm518, 1e-06, %v516
      %v521 = vsel %vm519, 1e-06, %v517
      %v522 = vsub.f32 %v497, %v506
      %v523 = vsub.f32 %v498, %v509
      %v524 = vrcp.pop %v520
      %v525 = vrcp.pop %v521
      %v526 = vmul.f32 %v522, %v524
      %v527 = vmul.f32 %v523, %v525
      %v528 = vsel %vm306, %v526, %v308
      %v529 = vsel %vm307, %v527, %v309
      %v530 = vsel %vm503, %v528, -inf
      %531 = vmax.xlane.f32.xlu0 %v530
      %v532 = vpop.xlane.xlu0 %531
      %v533 = vsel %vm503, %v529, -inf
      %534 = vmax.xlane.f32.xlu0 %v533
      %v535 = vpop.xlane.xlu0 %534
      %v536 = vsub.f32 %v528, %v532
      %v537 = vsub.f32 %v529, %v535
      %v538 = vmul.f32 %v536, 1.442695
      %v539 = vpow.pop %v538
      %v540 = vmul.f32 %v537, 1.442695
      %v541 = vpow.pop %v540
      %v542 = vsel %vm503, %v539, 0.0
      %543 = vadd.xlane.f32.xlu0 %v542
      %v544 = vpop.xlane.xlu0 %543
      %v545 = vsel %vm503, %v541, 0.0
      %546 = vadd.xlane.f32.xlu0 %v545
      %v547 = vpop.xlane.xlu0 %546
      %v548 = vrcp.pop %v544
      %v549 = vrcp.pop %v547
      %v550 = vmul.f32 %v539, %v548
      %v551 = vmul.f32 %v541, %v549
      %v552 = vpack.c.bf16 %v551, %v550
      %v554 = vsel %vm503, %v552, 0
      %556 = vmatprep.subr.bf16.mxu0 0
      %557 = vmatpush1.bf16.msra.mxu0 %v321
      %558 = vmatprep.subr.bf16.mxu0 0
      %559 = vmatpush1.bf16.msra.mxu0 %v322
      %560 = vmatprep.subr.bf16.mxu0 0
      %561 = vmatpush1.bf16.msra.mxu0 0
      %562 = vmatprep.subr.bf16.mxu0 0
      %563 = vmatpush1.bf16.msra.mxu0 0
      %564 = vmatprep.subr.bf16.mxu0 0
      %565 = vmatpush1.bf16.msra.mxu0 0
      %566 = vmatprep.subr.bf16.mxu0 0
      %567 = vmatpush1.bf16.msra.mxu0 0
      %568 = vmatprep.subr.bf16.mxu0 0
      %569 = vmatpush1.bf16.msra.mxu0 0
      %570 = vmatprep.subr.bf16.mxu0 0
      %571 = vmatpush1.bf16.msra.mxu0 0
      %572 = vmatprep.subr.bf16.mxu0 0
      %573 = vmatpush1.bf16.msra.mxu0 0
      %574 = vmatprep.subr.bf16.mxu0 0
      %575 = vmatpush1.bf16.msra.mxu0 0
      %576 = vmatprep.subr.bf16.mxu0 0
      %577 = vmatpush1.bf16.msra.mxu0 0
      %578 = vmatprep.subr.bf16.mxu0 0
      %579 = vmatpush1.bf16.msra.mxu0 0
      %580 = vmatprep.subr.bf16.mxu0 0
      %581 = vmatpush1.bf16.msra.mxu0 0
      %582 = vmatprep.subr.bf16.mxu0 0
      %583 = vmatpush1.bf16.msra.mxu0 0
      %584 = vmatprep.subr.bf16.mxu0 0
      %585 = vmatpush1.bf16.msra.mxu0 0
      %586 = vmatprep.subr.bf16.mxu0 0
      %587 = vmatpush1.bf16.msra.mxu0 0
      %588 = vmatprep.mubr.bf16.mxu0 0
      %589 = vmatmul.mubr.bf16.gmra.mrb[0].mxu0 %v554
      %v590 = vpop.f32.mrb[0].mxu0
      %v591 = vadd.f32 0.0, %v590
      %v592 = vpop.f32.mrb[0].mxu0
      %v593 = vpop.f32.mrb[0].mxu0
      %v594 = vadd.f32 0.0, %v593
      %v595 = vpop.f32.mrb[0].mxu0
      %596 = vdwg.mxu0
      %597 = vxpose.xlu0.b32.start [1/16] %v591, 128
      %598 = vxpose.xlu0.b32.cont [2/16] %v594, 128
      %599 = vxpose.xlu0.b32.cont [3/16] 0.0, 128
      %600 = vxpose.xlu0.b32.cont [4/16] 0.0, 128
      %601 = vxpose.xlu0.b32.cont [5/16] 0.0, 128
      %602 = vxpose.xlu0.b32.cont [6/16] 0.0, 128
      %603 = vxpose.xlu0.b32.cont [7/16] 0.0, 128
      %604 = vxpose.xlu0.b32.cont [8/16] 0.0, 128
      %605 = vxpose.xlu0.b32.cont [9/16] 0.0, 128
      %606 = vxpose.xlu0.b32.cont [10/16] 0.0, 128
      %607 = vxpose.xlu0.b32.cont [11/16] 0.0, 128
      %608 = vxpose.xlu0.b32.cont [12/16] 0.0, 128
      %609 = vxpose.xlu0.b32.cont [13/16] 0.0, 128
      %610 = vxpose.xlu0.b32.cont [14/16] 0.0, 128
      %611 = vxpose.xlu0.b32.cont [15/16] 0.0, 128
      %612 = vxpose.xlu0.b32.end [16/16] 0.0, 128
      %v613 = vpop.trf.xlu0
      %v614 = vpop.trf.xlu0
      %v615 = vpop.trf.xlu0
      %v616 = vpop.trf.xlu0
      %v617 = vpop.trf.xlu0
      %v618 = vpop.trf.xlu0
      %v619 = vpop.trf.xlu0
      %v620 = vpop.trf.xlu0
      %v621 = vpop.trf.xlu0
      %v622 = vpop.trf.xlu0
      %v623 = vpop.trf.xlu0
      %v624 = vpop.trf.xlu0
      %v625 = vpop.trf.xlu0
      %v626 = vpop.trf.xlu0
      %v627 = vpop.trf.xlu0
      %v628 = vpop.trf.xlu0
      %v629 = vpack.c.bf16 %v614, %v613
      %vm630 = vcmask 130048
      %v632 = vsel %vm630, %v629, 0
      %634 = vmatprep.subr.bf16.mxu0 0
      %635 = vmatpush1.bf16.msra.mxu0 %v316
      %636 = vmatprep.subr.bf16.mxu0 0
      %637 = vmatpush1.bf16.msra.mxu0 0
      %638 = vmatprep.subr.bf16.mxu0 0
      %639 = vmatpush1.bf16.msra.mxu0 0
      %640 = vmatprep.subr.bf16.mxu0 0
      %641 = vmatpush1.bf16.msra.mxu0 0
      %642 = vmatprep.subr.bf16.mxu0 0
      %643 = vmatpush1.bf16.msra.mxu0 0
      %644 = vmatprep.subr.bf16.mxu0 0
      %645 = vmatpush1.bf16.msra.mxu0 0
      %646 = vmatprep.subr.bf16.mxu0 0
      %647 = vmatpush1.bf16.msra.mxu0 0
      %648 = vmatprep.subr.bf16.mxu0 0
      %649 = vmatpush1.bf16.msra.mxu0 0
      %650 = vmatprep.subr.bf16.mxu0 0
      %651 = vmatpush1.bf16.msra.mxu0 0
      %652 = vmatprep.subr.bf16.mxu0 0
      %653 = vmatpush1.bf16.msra.mxu0 0
      %654 = vmatprep.subr.bf16.mxu0 0
      %655 = vmatpush1.bf16.msra.mxu0 0
      %656 = vmatprep.subr.bf16.mxu0 0
      %657 = vmatpush1.bf16.msra.mxu0 0
      %658 = vmatprep.subr.bf16.mxu0 0
      %659 = vmatpush1.bf16.msra.mxu0 0
      %660 = vmatprep.subr.bf16.mxu0 0
      %661 = vmatpush1.bf16.msra.mxu0 0
      %662 = vmatprep.subr.bf16.mxu0 0
      %663 = vmatpush1.bf16.msra.mxu0 0
      %664 = vmatprep.subr.bf16.mxu0 0
      %665 = vmatpush1.bf16.msra.mxu0 0
      %666 = vmatprep.mubr.bf16.mxu0 0
      %667 = vmatmul.mubr.bf16.gmra.mrb[0].mxu0 %v632
      %v668 = vpop.f32.mrb[0].mxu0
      %v669 = vadd.f32 0.0, %v668
      %v670 = vpop.f32.mrb[0].mxu0
      %v671 = vpop.f32.mrb[0].mxu0
      %v672 = vadd.f32 0.0, %v671
      %v673 = vpop.f32.mrb[0].mxu0
      %674 = vdwg.mxu0
      %v675 = vpack.c.bf16 %v672, %v669
      %v676 = vld [vmem:[%s7] sm:$0xff]
      %v677 = vld [vmem:[%s7 + $0x8] sm:$0xff]
      %679 = vset.pattern.permute.xlu0 0
      %680 = vperm.xlu0 %679, %v676
      %v681 = vpop.permute.xlu0 %680
      %684 = vset.pattern.permute.xlu0 0
      %685 = vperm.xlu0 %684, %v677
      %v686 = vpop.permute.xlu0 %685
      %v689 = vsel %vm325, %v675, 0
      %v691 = vsel %vm373, %v324, 0
      %693 = vmatprep.subr.bf16.mxu0 0
      %694 = vmatpush1.bf16.msra.mxu0 %v691
      %695 = vmatprep.subr.bf16.mxu0 0
      %696 = vmatpush1.bf16.msra.mxu0 0
      %697 = vmatprep.subr.bf16.mxu0 0
      %698 = vmatpush1.bf16.msra.mxu0 0
      %699 = vmatprep.subr.bf16.mxu0 0
      %700 = vmatpush1.bf16.msra.mxu0 0
      %701 = vmatprep.subr.bf16.mxu0 0
      %702 = vmatpush1.bf16.msra.mxu0 0
      %703 = vmatprep.subr.bf16.mxu0 0
      %704 = vmatpush1.bf16.msra.mxu0 0
      %705 = vmatprep.subr.bf16.mxu0 0
      %706 = vmatpush1.bf16.msra.mxu0 0
      %707 = vmatprep.subr.bf16.mxu0 0
      %708 = vmatpush1.bf16.msra.mxu0 0
      %709 = vmatprep.subr.bf16.mxu0 0
      %710 = vmatpush1.bf16.msra.mxu0 0
      %711 = vmatprep.subr.bf16.mxu0 0
      %712 = vmatpush1.bf16.msra.mxu0 0
      %713 = vmatprep.subr.bf16.mxu0 0
      %714 = vmatpush1.bf16.msra.mxu0 0
      %715 = vmatprep.subr.bf16.mxu0 0
      %716 = vmatpush1.bf16.msra.mxu0 0
      %717 = vmatprep.subr.bf16.mxu0 0
      %718 = vmatpush1.bf16.msra.mxu0 0
      %719 = vmatprep.subr.bf16.mxu0 0
      %720 = vmatpush1.bf16.msra.mxu0 0
      %721 = vmatprep.subr.bf16.mxu0 0
      %722 = vmatpush1.bf16.msra.mxu0 0
      %723 = vmatprep.subr.bf16.mxu0 0
      %724 = vmatpush1.bf16.msra.mxu0 0
      %725 = vmatprep.mubr.bf16.mxu0 0
      %726 = vmatmul.mubr.bf16.gmra.mrb[0].mxu0 %v689
      %v727 = vpop.f32.mrb[0].mxu0
      %v728 = vadd.f32 %v681, %v727
      %v729 = vpop.f32.mrb[0].mxu0
      %v730 = vpop.f32.mrb[0].mxu0
      %v731 = vadd.f32 %v686, %v730
      %v732 = vpop.f32.mrb[0].mxu0
      %733 = vdwg.mxu0
      %734 = vst.msk [vmem:[%s302] sm:$0xff] %vm325, %v728
      %735 = vst.msk [vmem:[%s302 + $0x8] sm:$0xff] %vm325, %v731
      %p736 = scmp.lt.s32.totalorder %s19, 1
      %s737 = scalar_select %p736, %s19, 1
      %s738 = smul.addr %s737, 2
      %s739 = smul.addr %s738, 8
      %s740 = scalar_lea.vmem %s8, %s739
      // Predicated region
      $region53: #{dis_attention.1} parent=51 // pred_check
        %p741 = pneg %p210
      $region54: #{dis_attention.1} parent=51 // pred_check_branch
        %743 = sbr.rel (%p741) target = $region56
      $region55: #{dis_attention.1} parent=51 // pred_region
        _
      $region56: #{dis_attention.1} parent=51 // pred_fallthru
        _
    $region52: #{dis_attention.1} parent=5 // pred_fallthru
      _
    %p744 = scmp.le.s32.totalorder 2, %s14
    // Predicated region
    $region57: #{dis_attention.1} parent=5 // pred_check
      %p745 = pneg %p744
    $region58: #{dis_attention.1} parent=5 // pred_check_branch
      %747 = sbr.rel (%p745) target = $region60
    $region59: #{dis_attention.1} parent=5 // pred_region
      %s748 = ssub.s32 %s14, 2
      // Predicated region
      $region61: #{dis_attention.1} parent=59 // pred_check
        %p749 = pneg %p216
      $region62: #{dis_attention.1} parent=59 // pred_check_branch
        %751 = sbr.rel (%p749) target = $region64
      $region63: #{dis_attention.1} parent=59 // pred_region
        %p752 = scmp.lt.s32.totalorder %s20, 1
        %s753 = scalar_select %p752, %s20, 1
        %s754 = smul.addr %s753, 2
        %s755 = smul.addr %s754, 8
        %s756 = scalar_lea.vmem %s8, %s755
      $region64: #{dis_attention.1} parent=59 // pred_fallthru
        _
    $region60: #{dis_attention.1} parent=5 // pred_fallthru
      _
  $region6: #{dis_attention.1} parent=0 // loop_footer
    %s18 = sadd.s32 1, %s14
  $region7: #{dis_attention.1} parent=0 // loop_footer_branch
    %13 = sbr.rel target = $region3
  $region8: #{dis_attention.1} parent=0 // loop_exit
    _

</llo_original>
